<compile_context>
chip_gen: v6e
topology: v6e:2x2x1
jax: 0.10.0
libtpu: 0.0.40
codegen_flags: <defaults>
</compile_context>

<pallas_src>
import functools

import jax
import jax.numpy as jnp
from jax import lax
from jax.experimental import pallas as pl
from jax.experimental.pallas import tpu as pltpu


def _round_up(x: int, m: int) -> int:
    return ((x + m - 1) // m) * m


def _pick_tiles():
    """Choose tile sizes / scoped-VMEM limit per TPU generation."""
    vmem_bytes = 64 << 20  # conservative default (v7x-class)
    try:
        info = pltpu.get_tpu_info()
        vmem_bytes = int(getattr(info, "vmem_capacity_bytes", vmem_bytes))
    except Exception:
        pass
    if vmem_bytes >= (100 << 20):
        # v5e / v6e: 128 MiB VMEM -> bigger output tiles halve HBM re-reads.
        return 1024, 1024, 512, 96 << 20
    # v7x (64 MiB VMEM) / unknown: 512-class tiles already reach the roofline.
    return 512, 512, 512, 48 << 20


def _make_addmm_kernel(K: int, tk: int):
    """addmm kernel: o = bias + a @ b, accumulated directly in o_ref (f32)."""
    k_rem = K % tk  # static; nonzero only when the last K tile is partial

    def kernel(bias_ref, a_ref, b_ref, o_ref):
        k = pl.program_id(2)
        a = a_ref[...]
        b = b_ref[...]
        if k_rem:
            # Zero the out-of-range K tail of the last K tile (OOB reads are
            # undefined); earlier steps get a no-op mask (limit == tk).
            limit = jnp.where(k == pl.num_programs(2) - 1, k_rem, tk)
            col = lax.broadcasted_iota(jnp.int32, a.shape, 1)
            a = jnp.where(col < limit, a, 0.0)
            row = lax.broadcasted_iota(jnp.int32, b.shape, 0)
            b = jnp.where(row < limit, b, 0.0)

        psum = jnp.dot(a, b, preferred_element_type=jnp.float32)

        @pl.when(k == 0)
        def _():
            # Bias folded into the first partial product: applied exactly
            # once, no separate init pass, no epilogue copy/cast.
            o_ref[...] = psum + bias_ref[0, 0]

        @pl.when(k > 0)
        def _():
            o_ref[...] += psum

    return kernel


@functools.partial(jax.jit, static_argnames=("tm", "tn", "tk", "vmem_limit_bytes"))
def _addmm_pallas_impl(bias, x2, x3, *, tm, tn, tk, vmem_limit_bytes):
    M, K = x2.shape
    K2, N = x3.shape
    assert K == K2, "inner dimensions must match"

    # Collapse small dims to a single (8,128)-aligned tile; keep large dims
    # at the requested (aligned) tile size.
    tm = min(tm, _round_up(M, 8))
    tn = min(tn, _round_up(N, 128))
    tk = K if K <= tk else tk  # full-K single step when it fits in one tile

    grid = (pl.cdiv(M, tm), pl.cdiv(N, tn), pl.cdiv(K, tk))

    bias = jnp.asarray(bias, dtype=jnp.float32).reshape(1, 1)

    return pl.pallas_call(
        _make_addmm_kernel(K, tk),
        out_shape=jax.ShapeDtypeStruct((M, N), jnp.float32),
        grid_spec=pltpu.PrefetchScalarGridSpec(
            num_scalar_prefetch=0,
            grid=grid,
            in_specs=[
                pl.BlockSpec(memory_space=pltpu.SMEM),            # scalar bias
                pl.BlockSpec((tm, tk), lambda i, j, k: (i, k)),   # x2 tile
                pl.BlockSpec((tk, tn), lambda i, j, k: (k, j)),   # x3 tile
            ],
            out_specs=pl.BlockSpec((tm, tn), lambda i, j, k: (i, j)),
        ),
        compiler_params=pltpu.CompilerParams(
            dimension_semantics=("parallel", "parallel", "arbitrary"),
            vmem_limit_bytes=vmem_limit_bytes,
        ),
        cost_estimate=pl.CostEstimate(
            flops=2 * M * N * K,
            bytes_accessed=4 * (M * K + K * N + M * N),
            transcendentals=0,
        ),
    )(bias, x2, x3)


def addmm_pallas(x1_scalar, x2, x3, *, tm=None, tn=None, tk=None):
    """out = x1_scalar + x2 @ x3  (torch.addmm with a scalar `input`)."""
    d_tm, d_tn, d_tk, vmem_limit = _pick_tiles()
    return _addmm_pallas_impl(
        x1_scalar, x2, x3,
        tm=tm or d_tm, tn=tn or d_tn, tk=tk or d_tk,
        vmem_limit_bytes=vmem_limit,
    )


def model_forward(x1, x2, x3):
    # NOTE: inputs could optionally be cast to bf16 here (halves HBM traffic,
    # native MXU rate) if the model tolerates it; kept f32 for fidelity.
    t1 = addmm_pallas(x1, x2, x3)
    # TODO(synk): torch.cat(t1, dim) in the source is invalid (single tensor,
    # undefined `dim`); concatenating a single tensor is the identity, so t1
    # is returned unchanged.
    t2 = t1
    return t2


if __name__ == "__main__":
    key = jax.random.PRNGKey(0)
    x1 = jnp.float32(10.0)   # scalar bias (torch.tensor(10.0))

    # Small shapes consistent with addmm(scalar, mat1, mat2):
    #   (64, 64, 64)    -- matches the module's 64x64 dims, tile-aligned
    #   (200, 500, 300) -- unaligned M/N single-tile path, full-K single step
    #   (120, 648, 260) -- K > tk path with masked K tail + partial N tile
    cases = [(64, 64, 64), (200, 500, 300), (120, 648, 260)]

    for idx, (M, K, N) in enumerate(cases):
        k2, k3 = jax.random.split(jax.random.fold_in(key, idx))
        x2 = jax.random.normal(k2, (M, K), dtype=jnp.float32)
        x3 = jax.random.normal(k3, (K, N), dtype=jnp.float32)

        out = model_forward(x1, x2, x3)
        jax.block_until_ready(out)

        ref = x1 + x2 @ x3
        assert out.shape == (M, N)
        assert jnp.allclose(out, ref, atol=5e-3, rtol=5e-3), (
            f"mismatch vs reference for shape {(M, K, N)}"
        )

    print("KERNEL_OK")
</pallas_src>

<mosaic_0001>
module attributes {stable_mosaic.version = 11 : i64} {
  func.func @kernel(%arg0: i32, %arg1: i32, %arg2: i32, %arg3: memref<1x1xf32, #tpu.memory_space<smem>>, %arg4: memref<64x64xf32, #tpu.memory_space<vmem>>, %arg5: memref<64x128xf32, #tpu.memory_space<vmem>>, %arg6: memref<64x128xf32, #tpu.memory_space<vmem>>) attributes {dimension_semantics = [#tpu.dimension_semantics<parallel>, #tpu.dimension_semantics<parallel>, #tpu.dimension_semantics<arbitrary>], iteration_bounds = array<i64: 1, 1, 1>, scalar_prefetch = 0 : i64, scratch_operands = 0 : i64, tpu.core_type = #tpu.core_type<tc>, window_params = [{transform_indices = @transform_0, window_bounds = array<i64: 1, 1>}, {transform_indices = @transform_1, window_bounds = array<i64: 64, 64>}, {transform_indices = @transform_2, window_bounds = array<i64: 64, 128>}, {transform_indices = @transform_3, window_bounds = array<i64: 64, 128>}]} {
    %c0 = arith.constant 0 : index
    %c0_0 = arith.constant 0 : index
    %0 = vector.load %arg4[%c0, %c0_0] : memref<64x64xf32, #tpu.memory_space<vmem>>, vector<64x64xf32>
    %c0_1 = arith.constant 0 : index
    %c0_2 = arith.constant 0 : index
    %1 = vector.load %arg5[%c0_1, %c0_2] : memref<64x128xf32, #tpu.memory_space<vmem>>, vector<64x128xf32>
    %cst = arith.constant dense<0.000000e+00> : vector<64x128xf32>
    %2 = tpu.matmul %0, %1, %cst {dimension_numbers = #tpu.dot_dimension_numbers<[1], [0], [0], [1], [0, 0, 1, 1], [], []>} : vector<64x64xf32>, vector<64x128xf32>, vector<64x128xf32> -> vector<64x128xf32>
    %c0_i32 = arith.constant 0 : i32
    %3 = arith.cmpi eq, %arg2, %c0_i32 : i32
    %4 = arith.extui %3 : i1 to i32
    %c0_i32_3 = arith.constant 0 : i32
    %5 = arith.cmpi ne, %4, %c0_i32_3 : i32
    scf.if %5 {
      %c0_6 = arith.constant 0 : index
      %c0_7 = arith.constant 0 : index
      %9 = memref.load %arg3[%c0_6, %c0_7] : memref<1x1xf32, #tpu.memory_space<smem>>
      %10 = vector.broadcast %9 : f32 to vector<64x128xf32>
      %11 = arith.addf %2, %10 : vector<64x128xf32>
      %c0_8 = arith.constant 0 : index
      %c0_9 = arith.constant 0 : index
      %12 = vector.load %arg6[%c0_8, %c0_9] : memref<64x128xf32, #tpu.memory_space<vmem>>, vector<64x128xf32>
      tpu.vector_store %arg6[%c0_8, %c0_9], %11 {strides = array<i32>} : memref<64x128xf32, #tpu.memory_space<vmem>>, vector<64x128xf32>,
    } else {
    }
    %c0_i32_4 = arith.constant 0 : i32
    %6 = arith.cmpi sgt, %arg2, %c0_i32_4 : i32
    %7 = arith.extui %6 : i1 to i32
    %c0_i32_5 = arith.constant 0 : i32
    %8 = arith.cmpi ne, %7, %c0_i32_5 : i32
    scf.if %8 {
      %c0_6 = arith.constant 0 : index
      %c0_7 = arith.constant 0 : index
      %9 = vector.load %arg6[%c0_6, %c0_7] : memref<64x128xf32, #tpu.memory_space<vmem>>, vector<64x128xf32>
      %10 = arith.addf %9, %2 : vector<64x128xf32>
      %c0_8 = arith.constant 0 : index
      %c0_9 = arith.constant 0 : index
      %11 = vector.load %arg6[%c0_8, %c0_9] : memref<64x128xf32, #tpu.memory_space<vmem>>, vector<64x128xf32>
      tpu.vector_store %arg6[%c0_8, %c0_9], %10 {strides = array<i32>} : memref<64x128xf32, #tpu.memory_space<vmem>>, vector<64x128xf32>,
    } else {
    }
    return
  }
  func.func @transform_0(%arg0: i32, %arg1: i32, %arg2: i32) -> (i32, i32) {
    %c0_i32 = arith.constant 0 : i32
    %c0_i32_0 = arith.constant 0 : i32
    %c0_i32_1 = arith.constant 0 : i32
    return %c0_i32, %c0_i32_0 : i32, i32
  }
  func.func @transform_1(%arg0: i32, %arg1: i32, %arg2: i32) -> (i32, i32) {
    %c0_i32 = arith.constant 0 : i32
    return %arg0, %arg2 : i32, i32
  }
  func.func @transform_2(%arg0: i32, %arg1: i32, %arg2: i32) -> (i32, i32) {
    %c0_i32 = arith.constant 0 : i32
    return %arg2, %arg1 : i32, i32
  }
  func.func @transform_3(%arg0: i32, %arg1: i32, %arg2: i32) -> (i32, i32) {
    %c0_i32 = arith.constant 0 : i32
    return %arg0, %arg1 : i32, i32
  }
}

</mosaic_0001>

<llo_original>
// kernel: _addmm_pallas_impl.1
$region0: #{_addmm_pallas_impl.1}
  #allocation0 [shape = 'u32[]', space=smem, size = 0x4, offset = 0x4, fixed_abs, tag = 'smem constant byte address 0x4 - core index']
  #allocation1 [shape = 'u32[144,128]{1,0:T(1,128)}', space=vmem, size = 0x12000, scoped, tag = 'internal scratch']
  #allocation2 [shape = 'f32[1,1]{1,0:T(1,128)S(6)}', space=smem, size = 0x200, scoped, tag = 'scoped memory for _addmm_pallas_impl.1']
  %s0 = inlined_call_operand.<no memory space> [shape: f32[1,1], index: 0, kind: input, shape index: {}]
  %s1 = inlined_call_operand.hbm [shape: f32[64,64], index: 1, kind: input, shape index: {}]
  %s2 = inlined_call_operand.hbm [shape: f32[64,64], index: 2, kind: input, shape index: {}]
  %s3 = inlined_call_operand.hbm [shape: f32[64,64], index: 3, kind: output, shape index: {}]
  %s4 = sld [smem:[#allocation0]]
  $region38: #{_addmm_pallas_impl.1} parent=0
    _
  %s6 = ssub.s32 1, %s4
  %s7 = scalar_select 0, %s6, %s4
  %8 = sst [smem:[#allocation2]] %s0
  $region1: #{_addmm_pallas_impl.1} parent=0
    #allocation3 [shape = 'u8[32768]{0}', space=vmem, size = 0x8000, scoped, tag = 'input window, operand 1, single buffered']
    #allocation4 [shape = 's32[1]{0}', space=sflag, size = 0x4, scoped, tag = 'scoped memory for _addmm_pallas_impl.1']
    #allocation5 [shape = 's32[1]{0}', space=sflag, size = 0x4, scoped, tag = 'scoped memory for _addmm_pallas_impl.1']
    #allocation6 [shape = 'u8[32768]{0}', space=vmem, size = 0x8000, scoped, tag = 'input window, operand 2, single buffered']
    #allocation7 [shape = 's32[1]{0}', space=sflag, size = 0x4, scoped, tag = 'scoped memory for _addmm_pallas_impl.1']
    #allocation8 [shape = 'u8[32768]{0}', space=vmem, size = 0x8000, scoped, tag = 'output window, operand 0, single buffered']
    %9 = vsyncpa [#allocation4], 0
    %10 = vsyncpa [#allocation7], 0
    %11 = vsyncpa [#allocation5], 0
    // Predicated region
    $region2: #{_addmm_pallas_impl.1} parent=1 // pred_check
      _
    $region3: #{_addmm_pallas_impl.1} parent=1 // pred_check_branch
      %13 = sbr.rel (0) target = $region5
    $region4: #{_addmm_pallas_impl.1} parent=1 // pred_region
      _
    $region5: #{_addmm_pallas_impl.1} parent=1 // pred_fallthru
      _
    // Predicated region
    $region6: #{_addmm_pallas_impl.1} parent=1 // pred_check
      _
    $region7: #{_addmm_pallas_impl.1} parent=1 // pred_check_branch
      %15 = sbr.rel (0) target = $region9
    $region8: #{_addmm_pallas_impl.1} parent=1 // pred_region
      %s17 = ssub.s32 1024, 1024
      %18 = vsyncadd [#allocation4], %s17
      %s19 = sshll.u32 [#allocation3], 4
      %s20 = int_to_ptr.vmem [resolvable:$true] %s19
      %25 = dma.hbm_to_vmem [thread:$0]  %s1, 1024, %s20, [#allocation4], 128, 128, 8
    $region9: #{_addmm_pallas_impl.1} parent=1 // pred_fallthru
      _
    // Predicated region
    $region10: #{_addmm_pallas_impl.1} parent=1 // pred_check
      _
    $region11: #{_addmm_pallas_impl.1} parent=1 // pred_check_branch
      %27 = sbr.rel (0) target = $region13
    $region12: #{_addmm_pallas_impl.1} parent=1 // pred_region
      %s29 = ssub.s32 1024, 1024
      %30 = vsyncadd [#allocation7], %s29
      %s31 = sshll.u32 [#allocation6], 4
      %s32 = int_to_ptr.vmem [resolvable:$true] %s31
      %37 = dma.hbm_to_vmem [thread:$0]  %s2, 1024, %s32, [#allocation7], 128, 128, 8
    $region13: #{_addmm_pallas_impl.1} parent=1 // pred_fallthru
      _
    // Predicated region
    $region14: #{_addmm_pallas_impl.1} parent=1 // pred_check
      _
    $region15: #{_addmm_pallas_impl.1} parent=1 // pred_check_branch
      %39 = sbr.rel (0) target = $region17
    $region16: #{_addmm_pallas_impl.1} parent=1 // pred_region
      %40 = dma.done [#allocation4], 1024
    $region17: #{_addmm_pallas_impl.1} parent=1 // pred_fallthru
      _
    // Predicated region
    $region18: #{_addmm_pallas_impl.1} parent=1 // pred_check
      _
    $region19: #{_addmm_pallas_impl.1} parent=1 // pred_check_branch
      %42 = sbr.rel (0) target = $region21
    $region20: #{_addmm_pallas_impl.1} parent=1 // pred_region
      %43 = dma.done [#allocation7], 1024
    $region21: #{_addmm_pallas_impl.1} parent=1 // pred_fallthru
      _
    %v44 = vld [vmem:[#allocation3] sm:$0xff]
    %v45 = vld [vmem:[#allocation3 + $0x8] sm:$0xff]
    %v46 = vld [vmem:[#allocation3 + $0x10] sm:$0xff]
    %v47 = vld [vmem:[#allocation3 + $0x18] sm:$0xff]
    %v48 = vld [vmem:[#allocation3 + $0x20] sm:$0xff]
    %v49 = vld [vmem:[#allocation3 + $0x28] sm:$0xff]
    %v50 = vld [vmem:[#allocation3 + $0x30] sm:$0xff]
    %v51 = vld [vmem:[#allocation3 + $0x38] sm:$0xff]
    %v52 = vld [vmem:[#allocation6] sm:$0xff]
    %v53 = vld [vmem:[#allocation6 + $0x8] sm:$0xff]
    %v54 = vld [vmem:[#allocation6 + $0x10] sm:$0xff]
    %v55 = vld [vmem:[#allocation6 + $0x18] sm:$0xff]
    %v56 = vld [vmem:[#allocation6 + $0x20] sm:$0xff]
    %v57 = vld [vmem:[#allocation6 + $0x28] sm:$0xff]
    %v58 = vld [vmem:[#allocation6 + $0x30] sm:$0xff]
    %v59 = vld [vmem:[#allocation6 + $0x38] sm:$0xff]
    %vm60 = vcmask 523264
    %v62 = vsel %vm60, %v44, 0
    %v65 = vsel %vm60, %v45, 0
    %v68 = vsel %vm60, %v46, 0
    %v71 = vsel %vm60, %v47, 0
    %v74 = vsel %vm60, %v48, 0
    %v77 = vsel %vm60, %v49, 0
    %v80 = vsel %vm60, %v50, 0
    %v83 = vsel %vm60, %v51, 0
    %85 = vmatprep.subr.mxu0 0.0
    %86 = vmatpush1.msra.mxu0 0.0
    %87 = vmatprep.subr.mxu0 0.0
    %88 = vmatpush1.msra.mxu0 0.0
    %89 = vmatprep.subr.mxu0 0.0
    %90 = vmatpush1.msra.mxu0 0.0
    %91 = vmatprep.subr.mxu0 0.0
    %92 = vmatpush1.msra.mxu0 0.0
    %93 = vmatprep.subr.mxu0 0.0
    %94 = vmatpush1.msra.mxu0 0.0
    %95 = vmatprep.subr.mxu0 0.0
    %96 = vmatpush1.msra.mxu0 0.0
    %97 = vmatprep.subr.mxu0 0.0
    %98 = vmatpush1.msra.mxu0 0.0
    %99 = vmatprep.subr.mxu0 0.0
    %100 = vmatpush1.msra.mxu0 0.0
    %101 = vmatprep.subr.mxu0 0.0
    %102 = vmatpush1.msra.mxu0 %v59
    %103 = vmatprep.subr.mxu0 0.0
    %104 = vmatpush1.msra.mxu0 %v58
    %105 = vmatprep.subr.mxu0 0.0
    %106 = vmatpush1.msra.mxu0 %v57
    %107 = vmatprep.subr.mxu0 0.0
    %108 = vmatpush1.msra.mxu0 %v56
    %109 = vmatprep.subr.mxu0 0.0
    %110 = vmatpush1.msra.mxu0 %v55
    %111 = vmatprep.subr.mxu0 0.0
    %112 = vmatpush1.msra.mxu0 %v54
    %113 = vmatprep.subr.mxu0 0.0
    %114 = vmatpush1.msra.mxu0 %v53
    %115 = vmatprep.subr.mxu0 0.0
    %116 = vmatpush1.msra.mxu0 %v52
    %117 = vmatprep.subr.mxu0 0.0
    %118 = vmatpush2.msra.mxu0 0.0
    %119 = vmatprep.subr.mxu0 0.0
    %120 = vmatpush2.msra.mxu0 0.0
    %121 = vmatprep.subr.mxu0 0.0
    %122 = vmatpush2.msra.mxu0 0.0
    %123 = vmatprep.subr.mxu0 0.0
    %124 = vmatpush2.msra.mxu0 0.0
    %125 = vmatprep.subr.mxu0 0.0
    %126 = vmatpush2.msra.mxu0 0.0
    %127 = vmatprep.subr.mxu0 0.0
    %128 = vmatpush2.msra.mxu0 0.0
    %129 = vmatprep.subr.mxu0 0.0
    %130 = vmatpush2.msra.mxu0 0.0
    %131 = vmatprep.subr.mxu0 0.0
    %132 = vmatpush2.msra.mxu0 0.0
    %133 = vmatprep.subr.mxu0 0.0
    %134 = vmatpush2.msra.mxu0 0.0
    %135 = vmatprep.subr.mxu0 0.0
    %136 = vmatpush2.msra.mxu0 0.0
    %137 = vmatprep.subr.mxu0 0.0
    %138 = vmatpush2.msra.mxu0 0.0
    %139 = vmatprep.subr.mxu0 0.0
    %140 = vmatpush2.msra.mxu0 0.0
    %141 = vmatprep.subr.mxu0 0.0
    %142 = vmatpush2.msra.mxu0 0.0
    %143 = vmatprep.subr.mxu0 0.0
    %144 = vmatpush2.msra.mxu0 0.0
    %145 = vmatprep.subr.mxu0 0.0
    %146 = vmatpush2.msra.mxu0 0.0
    %147 = vmatprep.subr.mxu0 0.0
    %148 = vmatpush2.msra.mxu0 0.0
    %149 = vmatprep.mubr.f32.mxu0 0.0
    %150 = vmatmul.mubr.f32.gmra.mxu0 %v62
    %v151 = vpop.f32.mrf.mxu0
    %v152 = vadd.f32 0.0, %v151
    %v153 = vpop.f32.mrf.mxu0
    %154 = vmatprep.mubr.f32.mxu0 0.0
    %155 = vmatmul.mubr.f32.gmra.mxu0 %v65
    %v156 = vpop.f32.mrf.mxu0
    %v157 = vadd.f32 0.0, %v156
    %v158 = vpop.f32.mrf.mxu0
    %159 = vmatprep.mubr.f32.mxu0 0.0
    %160 = vmatmul.mubr.f32.gmra.mxu0 %v68
    %v161 = vpop.f32.mrf.mxu0
    %v162 = vadd.f32 0.0, %v161
    %v163 = vpop.f32.mrf.mxu0
    %164 = vmatprep.mubr.f32.mxu0 0.0
    %165 = vmatmul.mubr.f32.gmra.mxu0 %v71
    %v166 = vpop.f32.mrf.mxu0
    %v167 = vadd.f32 0.0, %v166
    %v168 = vpop.f32.mrf.mxu0
    %169 = vmatprep.mubr.f32.mxu0 0.0
    %170 = vmatmul.mubr.f32.gmra.mxu0 %v74
    %v171 = vpop.f32.mrf.mxu0
    %v172 = vadd.f32 0.0, %v171
    %v173 = vpop.f32.mrf.mxu0
    %174 = vmatprep.mubr.f32.mxu0 0.0
    %175 = vmatmul.mubr.f32.gmra.mxu0 %v77
    %v176 = vpop.f32.mrf.mxu0
    %v177 = vadd.f32 0.0, %v176
    %v178 = vpop.f32.mrf.mxu0
    %179 = vmatprep.mubr.f32.mxu0 0.0
    %180 = vmatmul.mubr.f32.gmra.mxu0 %v80
    %v181 = vpop.f32.mrf.mxu0
    %v182 = vadd.f32 0.0, %v181
    %v183 = vpop.f32.mrf.mxu0
    %184 = vmatprep.mubr.f32.mxu0 0.0
    %185 = vmatmul.mubr.f32.gmra.mxu0 %v83
    %v186 = vpop.f32.mrf.mxu0
    %v187 = vadd.f32 0.0, %v186
    %v188 = vpop.f32.mrf.mxu0
    %189 = vdwg.mxu0
    %p190 = scmp.eq.s32.totalorder 0, 0
    // Predicated region
    $region22: #{_addmm_pallas_impl.1} parent=1 // pred_check
      %p191 = pneg %p190
    $region23: #{_addmm_pallas_impl.1} parent=1 // pred_check_branch
      %193 = sbr.rel (%p191) target = $region25
    $region24: #{_addmm_pallas_impl.1} parent=1 // pred_region
      %s194 = sld [smem:[#allocation2]]
      %v195 = vstv %s194
      %v196 = vadd.f32 %v152, %v195
      %v197 = vadd.f32 %v157, %v195
      %v198 = vadd.f32 %v162, %v195
      %v199 = vadd.f32 %v167, %v195
      %v200 = vadd.f32 %v172, %v195
      %v201 = vadd.f32 %v177, %v195
      %v202 = vadd.f32 %v182, %v195
      %v203 = vadd.f32 %v187, %v195
      %204 = vst [vmem:[#allocation8] sm:$0xff] %v196
      %205 = vst [vmem:[#allocation8 + $0x8] sm:$0xff] %v197
      %206 = vst [vmem:[#allocation8 + $0x10] sm:$0xff] %v198
      %207 = vst [vmem:[#allocation8 + $0x18] sm:$0xff] %v199
      %208 = vst [vmem:[#allocation8 + $0x20] sm:$0xff] %v200
      %209 = vst [vmem:[#allocation8 + $0x28] sm:$0xff] %v201
      %210 = vst [vmem:[#allocation8 + $0x30] sm:$0xff] %v202
      %211 = vst [vmem:[#allocation8 + $0x38] sm:$0xff] %v203
    $region25: #{_addmm_pallas_impl.1} parent=1 // pred_fallthru
      _
    %p212 = scmp.gt.s32.totalorder 0, 0
    // Predicated region
    $region26: #{_addmm_pallas_impl.1} parent=1 // pred_check
      %p213 = pneg %p212
    $region27: #{_addmm_pallas_impl.1} parent=1 // pred_check_branch
      %215 = sbr.rel (%p213) target = $region29
    $region28: #{_addmm_pallas_impl.1} parent=1 // pred_region
      %v216 = vld [vmem:[#allocation8] sm:$0xff]
      %v217 = vld [vmem:[#allocation8 + $0x8] sm:$0xff]
      %v218 = vld [vmem:[#allocation8 + $0x10] sm:$0xff]
      %v219 = vld [vmem:[#allocation8 + $0x18] sm:$0xff]
      %v220 = vld [vmem:[#allocation8 + $0x20] sm:$0xff]
      %v221 = vld [vmem:[#allocation8 + $0x28] sm:$0xff]
      %v222 = vld [vmem:[#allocation8 + $0x30] sm:$0xff]
      %v223 = vld [vmem:[#allocation8 + $0x38] sm:$0xff]
      %v224 = vadd.f32 %v216, %v152
      %v225 = vadd.f32 %v217, %v157
      %v226 = vadd.f32 %v218, %v162
      %v227 = vadd.f32 %v219, %v167
      %v228 = vadd.f32 %v220, %v172
      %v229 = vadd.f32 %v221, %v177
      %v230 = vadd.f32 %v222, %v182
      %v231 = vadd.f32 %v223, %v187
      %232 = vst [vmem:[#allocation8] sm:$0xff] %v224
      %233 = vst [vmem:[#allocation8 + $0x8] sm:$0xff] %v225
      %234 = vst [vmem:[#allocation8 + $0x10] sm:$0xff] %v226
      %235 = vst [vmem:[#allocation8 + $0x18] sm:$0xff] %v227
      %236 = vst [vmem:[#allocation8 + $0x20] sm:$0xff] %v228
      %237 = vst [vmem:[#allocation8 + $0x28] sm:$0xff] %v229
      %238 = vst [vmem:[#allocation8 + $0x30] sm:$0xff] %v230
      %239 = vst [vmem:[#allocation8 + $0x38] sm:$0xff] %v231
    $region29: #{_addmm_pallas_impl.1} parent=1 // pred_fallthru
      _
    // Predicated region
    $region30: #{_addmm_pallas_impl.1} parent=1 // pred_check
      _
    $region31: #{_addmm_pallas_impl.1} parent=1 // pred_check_branch
      %241 = sbr.rel (0) target = $region33
    $region32: #{_addmm_pallas_impl.1} parent=1 // pred_region
      %s243 = ssub.s32 1024, 1024
      %244 = vsyncadd [#allocation5], %s243
      %s245 = sshll.u32 [#allocation8], 4
      %s246 = int_to_ptr.vmem [resolvable:$true] %s245
      %251 = dma.vmem_to_hbm [thread:$0]  %s246, 1024, %s3, [#allocation5], 128, 128, 8
    $region33: #{_addmm_pallas_impl.1} parent=1 // pred_fallthru
      _
    // Predicated region
    $region34: #{_addmm_pallas_impl.1} parent=1 // pred_check
      _
    $region35: #{_addmm_pallas_impl.1} parent=1 // pred_check_branch
      %253 = sbr.rel (0) target = $region37
    $region36: #{_addmm_pallas_impl.1} parent=1 // pred_region
      %254 = dma.done [#allocation5], 1024
    $region37: #{_addmm_pallas_impl.1} parent=1 // pred_fallthru
      _
    %255 = vsyncpa [#allocation4], 1
    %256 = vsyncpa [#allocation7], 1
    %257 = vsyncpa [#allocation5], 1

</llo_original>
